<compile_context>
chip_gen: v7x
topology: tpu7x:2x2x1
jax: 0.10.0
libtpu: 0.0.40
codegen_flags: <defaults>
</compile_context>

<pallas_src>
import jax
import jax.numpy as jnp
from jax.experimental import pallas as pl
from jax.experimental.pallas import tpu as pltpu
import numpy as np


def rnn_kernel(ids_ref, emb_ref, h0_ref, w_ih_t_ref, w_hh_t_ref, b_ref,
               w_fc_t_ref, b_fc_ref, out_ref, hn_ref, x_scratch):
    """Fused forward pass.

    ids_ref   : (B, T) int32 token ids, SMEM
    emb_ref   : (V, 1, H) embedding table, VMEM (leading axis indexed dynamically)
    h0_ref    : (1, B, H) initial hidden state
    w_ih_t_ref: (H, H)  = W_ih^T   (x @ W layout)
    w_hh_t_ref: (H, H)  = W_hh^T
    b_ref     : (1, H)  = b_ih + b_hh
    w_fc_t_ref: (H, Opad) = W_fc^T zero-padded to 128 lanes
    b_fc_ref  : (1, Opad) b_fc, padded lanes = -1e30
    out_ref   : (B, Opad) log-probabilities (padded lanes garbage, sliced outside)
    hn_ref    : (1, B, H) final hidden state
    x_scratch : (T*B, H) VMEM scratch for gathered embeddings (time-major rows)
    """
    B, T = ids_ref.shape

    # --- fused embedding gather (time-major: row = t*B + b) ------------------
    for t in range(T):
        for b in range(B):
            tok = ids_ref[b, t]                       # scalar from SMEM
            x_scratch[pl.ds(t * B + b, 1), :] = emb_ref[tok]   # (1, H) row

    # --- hoisted input projection: one batched matmul + fused bias -----------
    xw = (jnp.dot(x_scratch[...], w_ih_t_ref[...],
                  preferred_element_type=jnp.float32)
          + b_ref[...])                               # (T*B, H)

    # --- serial tanh recurrence (true data dependence chain) -----------------
    w_hh_t = w_hh_t_ref[...]
    h = h0_ref[0]                                     # (B, H)
    for t in range(T):                                # fully unrolled, static slices
        pre = xw[t * B:(t + 1) * B, :] + jnp.dot(h, w_hh_t,
                                                 preferred_element_type=jnp.float32)
        h = jnp.tanh(pre)
    hn_ref[0] = h

    # --- last-step FC + log_softmax over a lane-dense (B, 128) slab ----------
    logits = (jnp.dot(h, w_fc_t_ref[...], preferred_element_type=jnp.float32)
              + b_fc_ref[...])                        # padded cols ~ -1e30
    m = jnp.max(logits, axis=-1, keepdims=True)
    shifted = logits - m
    lse = jnp.log(jnp.sum(jnp.exp(shifted), axis=-1, keepdims=True))
    out_ref[...] = shifted - lse


def simple_rnn_forward(inputs, hidden, params):
    """inputs: (B, T) int32 token ids; hidden: (1, B, H) float32."""
    emb, w_ih, w_hh, b_ih, b_hh, w_fc, b_fc = (
        params["emb"], params["w_ih"], params["w_hh"],
        params["b_ih"], params["b_hh"], params["w_fc"], params["b_fc"])

    B, T = inputs.shape
    V, H = emb.shape
    O = w_fc.shape[0]
    O_pad = ((O + 127) // 128) * 128                  # lane-dense output width

    # One-time trace-time layout plumbing (no in-kernel transposes).
    emb3 = emb.reshape(V, 1, H)                       # dynamic leading-axis gather
    w_ih_t = w_ih.T                                   # (H, H), x @ W layout
    w_hh_t = w_hh.T                                   # (H, H)
    bias = (b_ih + b_hh).reshape(1, H)                # folded RNN bias
    w_fc_t_pad = jnp.zeros((H, O_pad), jnp.float32).at[:, :O].set(w_fc.T)
    b_fc_pad = jnp.full((1, O_pad), -1e30, jnp.float32).at[:, :O].set(
        b_fc.reshape(1, O))                           # padded logits -> -1e30

    out_pad, hn = pl.pallas_call(
        rnn_kernel,
        out_shape=(
            jax.ShapeDtypeStruct((B, O_pad), jnp.float32),
            jax.ShapeDtypeStruct((1, B, H), jnp.float32),
        ),
        # Tiny problem: everything resident, single kernel invocation.
        in_specs=[
            pl.BlockSpec(memory_space=pltpu.MemorySpace.SMEM),   # token ids
            pl.BlockSpec(memory_space=pltpu.MemorySpace.VMEM),   # emb (V,1,H)
            pl.BlockSpec(memory_space=pltpu.MemorySpace.VMEM),   # h0
            pl.BlockSpec(memory_space=pltpu.MemorySpace.VMEM),   # w_ih_t
            pl.BlockSpec(memory_space=pltpu.MemorySpace.VMEM),   # w_hh_t
            pl.BlockSpec(memory_space=pltpu.MemorySpace.VMEM),   # bias
            pl.BlockSpec(memory_space=pltpu.MemorySpace.VMEM),   # w_fc_t (padded)
            pl.BlockSpec(memory_space=pltpu.MemorySpace.VMEM),   # b_fc (padded)
        ],
        out_specs=(pl.BlockSpec(memory_space=pltpu.MemorySpace.VMEM),
                   pl.BlockSpec(memory_space=pltpu.MemorySpace.VMEM)),
        scratch_shapes=[pltpu.VMEM((T * B, H), jnp.float32)],
    )(inputs.astype(jnp.int32), emb3, hidden, w_ih_t, w_hh_t, bias,
      w_fc_t_pad, b_fc_pad)

    return out_pad[:, :O], hn


def reference_forward(inputs, hidden, params):
    """Pure-JAX reference mirroring the PyTorch module semantics."""
    emb, w_ih, w_hh, b_ih, b_hh, w_fc, b_fc = (
        params["emb"], params["w_ih"], params["w_hh"],
        params["b_ih"], params["b_hh"], params["w_fc"], params["b_fc"])
    x = jnp.take(emb, inputs, axis=0)          # (B, T, H)
    h = hidden[0]                              # (B, H)
    T = x.shape[1]
    for t in range(T):
        h = jnp.tanh(x[:, t, :] @ w_ih.T + b_ih + h @ w_hh.T + b_hh)
    logits = h @ w_fc.T + b_fc
    logp = logits - jax.scipy.special.logsumexp(logits, axis=1, keepdims=True)
    return logp, h[None]


def init_params(key, input_size, hidden_size, output_size):
    ks = jax.random.split(key, 7)
    H = hidden_size
    bound = 1.0 / np.sqrt(H)
    return {
        # nn.Embedding: N(0, 1)
        "emb": jax.random.normal(ks[0], (input_size, H), jnp.float32),
        # nn.RNN / nn.Linear: U(-1/sqrt(H), 1/sqrt(H))
        "w_ih": jax.random.uniform(ks[1], (H, H), jnp.float32, -bound, bound),
        "w_hh": jax.random.uniform(ks[2], (H, H), jnp.float32, -bound, bound),
        "b_ih": jax.random.uniform(ks[3], (H,), jnp.float32, -bound, bound),
        "b_hh": jax.random.uniform(ks[4], (H,), jnp.float32, -bound, bound),
        "w_fc": jax.random.uniform(ks[5], (output_size, H), jnp.float32, -bound, bound),
        "b_fc": jax.random.uniform(ks[6], (output_size,), jnp.float32, -bound, bound),
    }


if __name__ == "__main__":
    input_size = 16    # vocab
    hidden_size = 32
    output_size = 10
    batch = 2
    seq = 8

    key = jax.random.PRNGKey(0)
    kp, ki = jax.random.split(key)
    params = init_params(kp, input_size, hidden_size, output_size)

    inputs = jax.random.randint(ki, (batch, seq), 0, input_size, jnp.int32)
    hidden = jnp.zeros((1, batch, hidden_size), jnp.float32)   # (num_layers, B, H)

    out, hn = simple_rnn_forward(inputs, hidden, params)
    out, hn = jax.block_until_ready((out, hn))

    ref_out, ref_hn = reference_forward(inputs, hidden, params)
    np.testing.assert_allclose(np.asarray(out), np.asarray(ref_out), rtol=1e-5, atol=1e-5)
    np.testing.assert_allclose(np.asarray(hn), np.asarray(ref_hn), rtol=1e-5, atol=1e-5)

    print("KERNEL_OK")
</pallas_src>

<mosaic_0001>
module attributes {stable_mosaic.version = 11 : i64} {
  func.func @rnn_kernel(%arg0: memref<2x8xi32, #tpu.memory_space<smem>>, %arg1: memref<16x1x32xf32, #tpu.memory_space<vmem>>, %arg2: memref<1x2x32xf32, #tpu.memory_space<vmem>>, %arg3: memref<32x32xf32, #tpu.memory_space<vmem>>, %arg4: memref<32x32xf32, #tpu.memory_space<vmem>>, %arg5: memref<1x32xf32, #tpu.memory_space<vmem>>, %arg6: memref<32x128xf32, #tpu.memory_space<vmem>>, %arg7: memref<1x128xf32, #tpu.memory_space<vmem>>, %arg8: memref<2x128xf32, #tpu.memory_space<vmem>>, %arg9: memref<1x2x32xf32, #tpu.memory_space<vmem>>, %arg10: memref<16x32xf32, #tpu.memory_space<vmem>>) attributes {dimension_semantics = [], scalar_prefetch = 0 : i64, scratch_operands = 1 : i64, tpu.core_type = #tpu.core_type<tc>} {
    %c0 = arith.constant 0 : index
    %c0_0 = arith.constant 0 : index
    %0 = memref.load %arg0[%c0, %c0_0] : memref<2x8xi32, #tpu.memory_space<smem>>
    %1 = arith.index_cast %0 : i32 to index
    %c0_1 = arith.constant 0 : index
    %c0_2 = arith.constant 0 : index
    %2 = vector.load %arg1[%1, %c0_1, %c0_2] : memref<16x1x32xf32, #tpu.memory_space<vmem>>, vector<1x1x32xf32>
    %3 = vector.shape_cast %2 : vector<1x1x32xf32> to vector<1x32xf32>
    %c0_3 = arith.constant 0 : index
    %c0_4 = arith.constant 0 : index
    %4 = vector.load %arg10[%c0_3, %c0_4] : memref<16x32xf32, #tpu.memory_space<vmem>>, vector<1x32xf32>
    tpu.vector_store %arg10[%c0_3, %c0_4], %3 {strides = array<i32>} : memref<16x32xf32, #tpu.memory_space<vmem>>, vector<1x32xf32>,
    %c1 = arith.constant 1 : index
    %c0_5 = arith.constant 0 : index
    %5 = memref.load %arg0[%c1, %c0_5] : memref<2x8xi32, #tpu.memory_space<smem>>
    %6 = arith.index_cast %5 : i32 to index
    %c0_6 = arith.constant 0 : index
    %c0_7 = arith.constant 0 : index
    %7 = vector.load %arg1[%6, %c0_6, %c0_7] : memref<16x1x32xf32, #tpu.memory_space<vmem>>, vector<1x1x32xf32>
    %8 = vector.shape_cast %7 : vector<1x1x32xf32> to vector<1x32xf32>
    %c1_8 = arith.constant 1 : index
    %c0_9 = arith.constant 0 : index
    %9 = vector.load %arg10[%c1_8, %c0_9] : memref<16x32xf32, #tpu.memory_space<vmem>>, vector<1x32xf32>
    tpu.vector_store %arg10[%c1_8, %c0_9], %8 {strides = array<i32>} : memref<16x32xf32, #tpu.memory_space<vmem>>, vector<1x32xf32>,
    %c0_10 = arith.constant 0 : index
    %c1_11 = arith.constant 1 : index
    %10 = memref.load %arg0[%c0_10, %c1_11] : memref<2x8xi32, #tpu.memory_space<smem>>
    %11 = arith.index_cast %10 : i32 to index
    %c0_12 = arith.constant 0 : index
    %c0_13 = arith.constant 0 : index
    %12 = vector.load %arg1[%11, %c0_12, %c0_13] : memref<16x1x32xf32, #tpu.memory_space<vmem>>, vector<1x1x32xf32>
    %13 = vector.shape_cast %12 : vector<1x1x32xf32> to vector<1x32xf32>
    %c2 = arith.constant 2 : index
    %c0_14 = arith.constant 0 : index
    %14 = vector.load %arg10[%c2, %c0_14] : memref<16x32xf32, #tpu.memory_space<vmem>>, vector<1x32xf32>
    tpu.vector_store %arg10[%c2, %c0_14], %13 {strides = array<i32>} : memref<16x32xf32, #tpu.memory_space<vmem>>, vector<1x32xf32>,
    %c1_15 = arith.constant 1 : index
    %c1_16 = arith.constant 1 : index
    %15 = memref.load %arg0[%c1_15, %c1_16] : memref<2x8xi32, #tpu.memory_space<smem>>
    %16 = arith.index_cast %15 : i32 to index
    %c0_17 = arith.constant 0 : index
    %c0_18 = arith.constant 0 : index
    %17 = vector.load %arg1[%16, %c0_17, %c0_18] : memref<16x1x32xf32, #tpu.memory_space<vmem>>, vector<1x1x32xf32>
    %18 = vector.shape_cast %17 : vector<1x1x32xf32> to vector<1x32xf32>
    %c3 = arith.constant 3 : index
    %c0_19 = arith.constant 0 : index
    %19 = vector.load %arg10[%c3, %c0_19] : memref<16x32xf32, #tpu.memory_space<vmem>>, vector<1x32xf32>
    tpu.vector_store %arg10[%c3, %c0_19], %18 {strides = array<i32>} : memref<16x32xf32, #tpu.memory_space<vmem>>, vector<1x32xf32>,
    %c0_20 = arith.constant 0 : index
    %c2_21 = arith.constant 2 : index
    %20 = memref.load %arg0[%c0_20, %c2_21] : memref<2x8xi32, #tpu.memory_space<smem>>
    %21 = arith.index_cast %20 : i32 to index
    %c0_22 = arith.constant 0 : index
    %c0_23 = arith.constant 0 : index
    %22 = vector.load %arg1[%21, %c0_22, %c0_23] : memref<16x1x32xf32, #tpu.memory_space<vmem>>, vector<1x1x32xf32>
    %23 = vector.shape_cast %22 : vector<1x1x32xf32> to vector<1x32xf32>
    %c4 = arith.constant 4 : index
    %c0_24 = arith.constant 0 : index
    %24 = vector.load %arg10[%c4, %c0_24] : memref<16x32xf32, #tpu.memory_space<vmem>>, vector<1x32xf32>
    tpu.vector_store %arg10[%c4, %c0_24], %23 {strides = array<i32>} : memref<16x32xf32, #tpu.memory_space<vmem>>, vector<1x32xf32>,
    %c1_25 = arith.constant 1 : index
    %c2_26 = arith.constant 2 : index
    %25 = memref.load %arg0[%c1_25, %c2_26] : memref<2x8xi32, #tpu.memory_space<smem>>
    %26 = arith.index_cast %25 : i32 to index
    %c0_27 = arith.constant 0 : index
    %c0_28 = arith.constant 0 : index
    %27 = vector.load %arg1[%26, %c0_27, %c0_28] : memref<16x1x32xf32, #tpu.memory_space<vmem>>, vector<1x1x32xf32>
    %28 = vector.shape_cast %27 : vector<1x1x32xf32> to vector<1x32xf32>
    %c5 = arith.constant 5 : index
    %c0_29 = arith.constant 0 : index
    %29 = vector.load %arg10[%c5, %c0_29] : memref<16x32xf32, #tpu.memory_space<vmem>>, vector<1x32xf32>
    tpu.vector_store %arg10[%c5, %c0_29], %28 {strides = array<i32>} : memref<16x32xf32, #tpu.memory_space<vmem>>, vector<1x32xf32>,
    %c0_30 = arith.constant 0 : index
    %c3_31 = arith.constant 3 : index
    %30 = memref.load %arg0[%c0_30, %c3_31] : memref<2x8xi32, #tpu.memory_space<smem>>
    %31 = arith.index_cast %30 : i32 to index
    %c0_32 = arith.constant 0 : index
    %c0_33 = arith.constant 0 : index
    %32 = vector.load %arg1[%31, %c0_32, %c0_33] : memref<16x1x32xf32, #tpu.memory_space<vmem>>, vector<1x1x32xf32>
    %33 = vector.shape_cast %32 : vector<1x1x32xf32> to vector<1x32xf32>
    %c6 = arith.constant 6 : index
    %c0_34 = arith.constant 0 : index
    %34 = vector.load %arg10[%c6, %c0_34] : memref<16x32xf32, #tpu.memory_space<vmem>>, vector<1x32xf32>
    tpu.vector_store %arg10[%c6, %c0_34], %33 {strides = array<i32>} : memref<16x32xf32, #tpu.memory_space<vmem>>, vector<1x32xf32>,
    %c1_35 = arith.constant 1 : index
    %c3_36 = arith.constant 3 : index
    %35 = memref.load %arg0[%c1_35, %c3_36] : memref<2x8xi32, #tpu.memory_space<smem>>
    %36 = arith.index_cast %35 : i32 to index
    %c0_37 = arith.constant 0 : index
    %c0_38 = arith.constant 0 : index
    %37 = vector.load %arg1[%36, %c0_37, %c0_38] : memref<16x1x32xf32, #tpu.memory_space<vmem>>, vector<1x1x32xf32>
    %38 = vector.shape_cast %37 : vector<1x1x32xf32> to vector<1x32xf32>
    %c7 = arith.constant 7 : index
    %c0_39 = arith.constant 0 : index
    %39 = vector.load %arg10[%c7, %c0_39] : memref<16x32xf32, #tpu.memory_space<vmem>>, vector<1x32xf32>
    tpu.vector_store %arg10[%c7, %c0_39], %38 {strides = array<i32>} : memref<16x32xf32, #tpu.memory_space<vmem>>, vector<1x32xf32>,
    %c0_40 = arith.constant 0 : index
    %c4_41 = arith.constant 4 : index
    %40 = memref.load %arg0[%c0_40, %c4_41] : memref<2x8xi32, #tpu.memory_space<smem>>
    %41 = arith.index_cast %40 : i32 to index
    %c0_42 = arith.constant 0 : index
    %c0_43 = arith.constant 0 : index
    %42 = vector.load %arg1[%41, %c0_42, %c0_43] : memref<16x1x32xf32, #tpu.memory_space<vmem>>, vector<1x1x32xf32>
    %43 = vector.shape_cast %42 : vector<1x1x32xf32> to vector<1x32xf32>
    %c8 = arith.constant 8 : index
    %c0_44 = arith.constant 0 : index
    %44 = vector.load %arg10[%c8, %c0_44] : memref<16x32xf32, #tpu.memory_space<vmem>>, vector<1x32xf32>
    tpu.vector_store %arg10[%c8, %c0_44], %43 {strides = array<i32>} : memref<16x32xf32, #tpu.memory_space<vmem>>, vector<1x32xf32>,
    %c1_45 = arith.constant 1 : index
    %c4_46 = arith.constant 4 : index
    %45 = memref.load %arg0[%c1_45, %c4_46] : memref<2x8xi32, #tpu.memory_space<smem>>
    %46 = arith.index_cast %45 : i32 to index
    %c0_47 = arith.constant 0 : index
    %c0_48 = arith.constant 0 : index
    %47 = vector.load %arg1[%46, %c0_47, %c0_48] : memref<16x1x32xf32, #tpu.memory_space<vmem>>, vector<1x1x32xf32>
    %48 = vector.shape_cast %47 : vector<1x1x32xf32> to vector<1x32xf32>
    %c9 = arith.constant 9 : index
    %c0_49 = arith.constant 0 : index
    %49 = vector.load %arg10[%c9, %c0_49] : memref<16x32xf32, #tpu.memory_space<vmem>>, vector<1x32xf32>
    tpu.vector_store %arg10[%c9, %c0_49], %48 {strides = array<i32>} : memref<16x32xf32, #tpu.memory_space<vmem>>, vector<1x32xf32>,
    %c0_50 = arith.constant 0 : index
    %c5_51 = arith.constant 5 : index
    %50 = memref.load %arg0[%c0_50, %c5_51] : memref<2x8xi32, #tpu.memory_space<smem>>
    %51 = arith.index_cast %50 : i32 to index
    %c0_52 = arith.constant 0 : index
    %c0_53 = arith.constant 0 : index
    %52 = vector.load %arg1[%51, %c0_52, %c0_53] : memref<16x1x32xf32, #tpu.memory_space<vmem>>, vector<1x1x32xf32>
    %53 = vector.shape_cast %52 : vector<1x1x32xf32> to vector<1x32xf32>
    %c10 = arith.constant 10 : index
    %c0_54 = arith.constant 0 : index
    %54 = vector.load %arg10[%c10, %c0_54] : memref<16x32xf32, #tpu.memory_space<vmem>>, vector<1x32xf32>
    tpu.vector_store %arg10[%c10, %c0_54], %53 {strides = array<i32>} : memref<16x32xf32, #tpu.memory_space<vmem>>, vector<1x32xf32>,
    %c1_55 = arith.constant 1 : index
    %c5_56 = arith.constant 5 : index
    %55 = memref.load %arg0[%c1_55, %c5_56] : memref<2x8xi32, #tpu.memory_space<smem>>
    %56 = arith.index_cast %55 : i32 to index
    %c0_57 = arith.constant 0 : index
    %c0_58 = arith.constant 0 : index
    %57 = vector.load %arg1[%56, %c0_57, %c0_58] : memref<16x1x32xf32, #tpu.memory_space<vmem>>, vector<1x1x32xf32>
    %58 = vector.shape_cast %57 : vector<1x1x32xf32> to vector<1x32xf32>
    %c11 = arith.constant 11 : index
    %c0_59 = arith.constant 0 : index
    %59 = vector.load %arg10[%c11, %c0_59] : memref<16x32xf32, #tpu.memory_space<vmem>>, vector<1x32xf32>
    tpu.vector_store %arg10[%c11, %c0_59], %58 {strides = array<i32>} : memref<16x32xf32, #tpu.memory_space<vmem>>, vector<1x32xf32>,
    %c0_60 = arith.constant 0 : index
    %c6_61 = arith.constant 6 : index
    %60 = memref.load %arg0[%c0_60, %c6_61] : memref<2x8xi32, #tpu.memory_space<smem>>
    %61 = arith.index_cast %60 : i32 to index
    %c0_62 = arith.constant 0 : index
    %c0_63 = arith.constant 0 : index
    %62 = vector.load %arg1[%61, %c0_62, %c0_63] : memref<16x1x32xf32, #tpu.memory_space<vmem>>, vector<1x1x32xf32>
    %63 = vector.shape_cast %62 : vector<1x1x32xf32> to vector<1x32xf32>
    %c12 = arith.constant 12 : index
    %c0_64 = arith.constant 0 : index
    %64 = vector.load %arg10[%c12, %c0_64] : memref<16x32xf32, #tpu.memory_space<vmem>>, vector<1x32xf32>
    tpu.vector_store %arg10[%c12, %c0_64], %63 {strides = array<i32>} : memref<16x32xf32, #tpu.memory_space<vmem>>, vector<1x32xf32>,
    %c1_65 = arith.constant 1 : index
    %c6_66 = arith.constant 6 : index
    %65 = memref.load %arg0[%c1_65, %c6_66] : memref<2x8xi32, #tpu.memory_space<smem>>
    %66 = arith.index_cast %65 : i32 to index
    %c0_67 = arith.constant 0 : index
    %c0_68 = arith.constant 0 : index
    %67 = vector.load %arg1[%66, %c0_67, %c0_68] : memref<16x1x32xf32, #tpu.memory_space<vmem>>, vector<1x1x32xf32>
    %68 = vector.shape_cast %67 : vector<1x1x32xf32> to vector<1x32xf32>
    %c13 = arith.constant 13 : index
    %c0_69 = arith.constant 0 : index
    %69 = vector.load %arg10[%c13, %c0_69] : memref<16x32xf32, #tpu.memory_space<vmem>>, vector<1x32xf32>
    tpu.vector_store %arg10[%c13, %c0_69], %68 {strides = array<i32>} : memref<16x32xf32, #tpu.memory_space<vmem>>, vector<1x32xf32>,
    %c0_70 = arith.constant 0 : index
    %c7_71 = arith.constant 7 : index
    %70 = memref.load %arg0[%c0_70, %c7_71] : memref<2x8xi32, #tpu.memory_space<smem>>
    %71 = arith.index_cast %70 : i32 to index
    %c0_72 = arith.constant 0 : index
    %c0_73 = arith.constant 0 : index
    %72 = vector.load %arg1[%71, %c0_72, %c0_73] : memref<16x1x32xf32, #tpu.memory_space<vmem>>, vector<1x1x32xf32>
    %73 = vector.shape_cast %72 : vector<1x1x32xf32> to vector<1x32xf32>
    %c14 = arith.constant 14 : index
    %c0_74 = arith.constant 0 : index
    %74 = vector.load %arg10[%c14, %c0_74] : memref<16x32xf32, #tpu.memory_space<vmem>>, vector<1x32xf32>
    tpu.vector_store %arg10[%c14, %c0_74], %73 {strides = array<i32>} : memref<16x32xf32, #tpu.memory_space<vmem>>, vector<1x32xf32>,
    %c1_75 = arith.constant 1 : index
    %c7_76 = arith.constant 7 : index
    %75 = memref.load %arg0[%c1_75, %c7_76] : memref<2x8xi32, #tpu.memory_space<smem>>
    %76 = arith.index_cast %75 : i32 to index
    %c0_77 = arith.constant 0 : index
    %c0_78 = arith.constant 0 : index
    %77 = vector.load %arg1[%76, %c0_77, %c0_78] : memref<16x1x32xf32, #tpu.memory_space<vmem>>, vector<1x1x32xf32>
    %78 = vector.shape_cast %77 : vector<1x1x32xf32> to vector<1x32xf32>
    %c15 = arith.constant 15 : index
    %c0_79 = arith.constant 0 : index
    %79 = vector.load %arg10[%c15, %c0_79] : memref<16x32xf32, #tpu.memory_space<vmem>>, vector<1x32xf32>
    tpu.vector_store %arg10[%c15, %c0_79], %78 {strides = array<i32>} : memref<16x32xf32, #tpu.memory_space<vmem>>, vector<1x32xf32>,
    %c0_80 = arith.constant 0 : index
    %c0_81 = arith.constant 0 : index
    %80 = vector.load %arg10[%c0_80, %c0_81] : memref<16x32xf32, #tpu.memory_space<vmem>>, vector<16x32xf32>
    %c0_82 = arith.constant 0 : index
    %c0_83 = arith.constant 0 : index
    %81 = vector.load %arg3[%c0_82, %c0_83] : memref<32x32xf32, #tpu.memory_space<vmem>>, vector<32x32xf32>
    %cst = arith.constant dense<0.000000e+00> : vector<16x32xf32>
    %82 = tpu.matmul %80, %81, %cst {dimension_numbers = #tpu.dot_dimension_numbers<[1], [0], [0], [1], [0, 0, 1, 1], [], []>} : vector<16x32xf32>, vector<32x32xf32>, vector<16x32xf32> -> vector<16x32xf32>
    %c0_84 = arith.constant 0 : index
    %c0_85 = arith.constant 0 : index
    %83 = vector.load %arg5[%c0_84, %c0_85] : memref<1x32xf32, #tpu.memory_space<vmem>>, vector<1x32xf32>
    %84 = vector.broadcast %83 : vector<1x32xf32> to vector<16x32xf32>
    %85 = arith.addf %82, %84 : vector<16x32xf32>
    %c0_86 = arith.constant 0 : index
    %c0_87 = arith.constant 0 : index
    %86 = vector.load %arg4[%c0_86, %c0_87] : memref<32x32xf32, #tpu.memory_space<vmem>>, vector<32x32xf32>
    %c0_88 = arith.constant 0 : index
    %c0_89 = arith.constant 0 : index
    %c0_90 = arith.constant 0 : index
    %87 = vector.load %arg2[%c0_88, %c0_89, %c0_90] : memref<1x2x32xf32, #tpu.memory_space<vmem>>, vector<1x2x32xf32>
    %88 = vector.shape_cast %87 : vector<1x2x32xf32> to vector<2x32xf32>
    %89 = vector.extract_strided_slice %85 {offsets = [0, 0], sizes = [2, 32], strides = [1, 1]} : vector<16x32xf32> to vector<2x32xf32>
    %cst_91 = arith.constant dense<0.000000e+00> : vector<2x32xf32>
    %90 = tpu.matmul %88, %86, %cst_91 {dimension_numbers = #tpu.dot_dimension_numbers<[1], [0], [0], [1], [0, 0, 1, 1], [], []>} : vector<2x32xf32>, vector<32x32xf32>, vector<2x32xf32> -> vector<2x32xf32>
    %91 = arith.addf %89, %90 : vector<2x32xf32>
    %92 = math.tanh %91 : vector<2x32xf32>
    %93 = vector.extract_strided_slice %85 {offsets = [2, 0], sizes = [2, 32], strides = [1, 1]} : vector<16x32xf32> to vector<2x32xf32>
    %cst_92 = arith.constant dense<0.000000e+00> : vector<2x32xf32>
    %94 = tpu.matmul %92, %86, %cst_92 {dimension_numbers = #tpu.dot_dimension_numbers<[1], [0], [0], [1], [0, 0, 1, 1], [], []>} : vector<2x32xf32>, vector<32x32xf32>, vector<2x32xf32> -> vector<2x32xf32>
    %95 = arith.addf %93, %94 : vector<2x32xf32>
    %96 = math.tanh %95 : vector<2x32xf32>
    %97 = vector.extract_strided_slice %85 {offsets = [4, 0], sizes = [2, 32], strides = [1, 1]} : vector<16x32xf32> to vector<2x32xf32>
    %cst_93 = arith.constant dense<0.000000e+00> : vector<2x32xf32>
    %98 = tpu.matmul %96, %86, %cst_93 {dimension_numbers = #tpu.dot_dimension_numbers<[1], [0], [0], [1], [0, 0, 1, 1], [], []>} : vector<2x32xf32>, vector<32x32xf32>, vector<2x32xf32> -> vector<2x32xf32>
    %99 = arith.addf %97, %98 : vector<2x32xf32>
    %100 = math.tanh %99 : vector<2x32xf32>
    %101 = vector.extract_strided_slice %85 {offsets = [6, 0], sizes = [2, 32], strides = [1, 1]} : vector<16x32xf32> to vector<2x32xf32>
    %cst_94 = arith.constant dense<0.000000e+00> : vector<2x32xf32>
    %102 = tpu.matmul %100, %86, %cst_94 {dimension_numbers = #tpu.dot_dimension_numbers<[1], [0], [0], [1], [0, 0, 1, 1], [], []>} : vector<2x32xf32>, vector<32x32xf32>, vector<2x32xf32> -> vector<2x32xf32>
    %103 = arith.addf %101, %102 : vector<2x32xf32>
    %104 = math.tanh %103 : vector<2x32xf32>
    %105 = vector.extract_strided_slice %85 {offsets = [8, 0], sizes = [2, 32], strides = [1, 1]} : vector<16x32xf32> to vector<2x32xf32>
    %cst_95 = arith.constant dense<0.000000e+00> : vector<2x32xf32>
    %106 = tpu.matmul %104, %86, %cst_95 {dimension_numbers = #tpu.dot_dimension_numbers<[1], [0], [0], [1], [0, 0, 1, 1], [], []>} : vector<2x32xf32>, vector<32x32xf32>, vector<2x32xf32> -> vector<2x32xf32>
    %107 = arith.addf %105, %106 : vector<2x32xf32>
    %108 = math.tanh %107 : vector<2x32xf32>
    %109 = vector.extract_strided_slice %85 {offsets = [10, 0], sizes = [2, 32], strides = [1, 1]} : vector<16x32xf32> to vector<2x32xf32>
    %cst_96 = arith.constant dense<0.000000e+00> : vector<2x32xf32>
    %110 = tpu.matmul %108, %86, %cst_96 {dimension_numbers = #tpu.dot_dimension_numbers<[1], [0], [0], [1], [0, 0, 1, 1], [], []>} : vector<2x32xf32>, vector<32x32xf32>, vector<2x32xf32> -> vector<2x32xf32>
    %111 = arith.addf %109, %110 : vector<2x32xf32>
    %112 = math.tanh %111 : vector<2x32xf32>
    %113 = vector.extract_strided_slice %85 {offsets = [12, 0], sizes = [2, 32], strides = [1, 1]} : vector<16x32xf32> to vector<2x32xf32>
    %cst_97 = arith.constant dense<0.000000e+00> : vector<2x32xf32>
    %114 = tpu.matmul %112, %86, %cst_97 {dimension_numbers = #tpu.dot_dimension_numbers<[1], [0], [0], [1], [0, 0, 1, 1], [], []>} : vector<2x32xf32>, vector<32x32xf32>, vector<2x32xf32> -> vector<2x32xf32>
    %115 = arith.addf %113, %114 : vector<2x32xf32>
    %116 = math.tanh %115 : vector<2x32xf32>
    %117 = vector.extract_strided_slice %85 {offsets = [14, 0], sizes = [2, 32], strides = [1, 1]} : vector<16x32xf32> to vector<2x32xf32>
    %cst_98 = arith.constant dense<0.000000e+00> : vector<2x32xf32>
    %118 = tpu.matmul %116, %86, %cst_98 {dimension_numbers = #tpu.dot_dimension_numbers<[1], [0], [0], [1], [0, 0, 1, 1], [], []>} : vector<2x32xf32>, vector<32x32xf32>, vector<2x32xf32> -> vector<2x32xf32>
    %119 = arith.addf %117, %118 : vector<2x32xf32>
    %120 = math.tanh %119 : vector<2x32xf32>
    %c0_99 = arith.constant 0 : index
    %c0_100 = arith.constant 0 : index
    %c0_101 = arith.constant 0 : index
    %121 = vector.load %arg9[%c0_99, %c0_100, %c0_101] : memref<1x2x32xf32, #tpu.memory_space<vmem>>, vector<1x2x32xf32>
    %122 = vector.shape_cast %121 : vector<1x2x32xf32> to vector<2x32xf32>
    %123 = vector.shape_cast %120 : vector<2x32xf32> to vector<1x2x32xf32>
    tpu.vector_store %arg9[%c0_99, %c0_100, %c0_101], %123 {strides = array<i32>} : memref<1x2x32xf32, #tpu.memory_space<vmem>>, vector<1x2x32xf32>,
    %c0_102 = arith.constant 0 : index
    %c0_103 = arith.constant 0 : index
    %124 = vector.load %arg6[%c0_102, %c0_103] : memref<32x128xf32, #tpu.memory_space<vmem>>, vector<32x128xf32>
    %cst_104 = arith.constant dense<0.000000e+00> : vector<2x128xf32>
    %125 = tpu.matmul %120, %124, %cst_104 {dimension_numbers = #tpu.dot_dimension_numbers<[1], [0], [0], [1], [0, 0, 1, 1], [], []>} : vector<2x32xf32>, vector<32x128xf32>, vector<2x128xf32> -> vector<2x128xf32>
    %c0_105 = arith.constant 0 : index
    %c0_106 = arith.constant 0 : index
    %126 = vector.load %arg7[%c0_105, %c0_106] : memref<1x128xf32, #tpu.memory_space<vmem>>, vector<1x128xf32>
    %127 = vector.broadcast %126 : vector<1x128xf32> to vector<2x128xf32>
    %128 = arith.addf %125, %127 : vector<2x128xf32>
    %cst_107 = arith.constant dense<0xFF800000> : vector<2xf32>
    %129 = vector.multi_reduction <maximumf>, %128, %cst_107 [1] : vector<2x128xf32> to vector<2xf32>
    %130 = vector.shape_cast %129 : vector<2xf32> to vector<2x1xf32>
    %131 = vector.broadcast %130 : vector<2x1xf32> to vector<2x128xf32>
    %132 = arith.subf %128, %131 : vector<2x128xf32>
    %133 = math.exp %132 : vector<2x128xf32>
    %cst_108 = arith.constant dense<0.000000e+00> : vector<2xf32>
    %134 = vector.multi_reduction <add>, %133, %cst_108 [1] : vector<2x128xf32> to vector<2xf32>
    %135 = vector.shape_cast %134 : vector<2xf32> to vector<2x1xf32>
    %136 = math.log %135 : vector<2x1xf32>
    %137 = vector.broadcast %136 : vector<2x1xf32> to vector<2x128xf32>
    %138 = arith.subf %132, %137 : vector<2x128xf32>
    %c0_109 = arith.constant 0 : index
    %c0_110 = arith.constant 0 : index
    %139 = vector.load %arg8[%c0_109, %c0_110] : memref<2x128xf32, #tpu.memory_space<vmem>>, vector<2x128xf32>
    tpu.vector_store %arg8[%c0_109, %c0_110], %138 {strides = array<i32>} : memref<2x128xf32, #tpu.memory_space<vmem>>, vector<2x128xf32>,
    return
  }
}

</mosaic_0001>

<llo_original>
// kernel: tpu_custom_call.1
$region0: #{tpu_custom_call.1}
  #allocation0 [shape = 'u32[]', space=smem, size = 0x4, offset = 0x4, fixed_abs, tag = 'smem constant byte address 0x4 - core index']
  #allocation1 [shape = 'u32[144,128]{1,0:T(1,128)}', space=vmem, size = 0x12000, scoped, tag = 'internal scratch']
  #allocation2 [shape = 'f32[16,32]{1,0:T(8,128)}', space=vmem, size = 0x2000, scoped, tag = 'scratch operand']
  %s0 = inlined_call_operand.hbm [shape: s32[2,8], index: 0, kind: input, shape index: {}]
  %s1 = inlined_call_operand.hbm [shape: f32[16,1,32], index: 1, kind: input, shape index: {}]
  %s2 = inlined_call_operand.vmem [shape: f32[1,2,32], index: 2, kind: input, shape index: {}]
  %s3 = inlined_call_operand.hbm [shape: f32[32,32], index: 3, kind: input, shape index: {}]
  %s4 = inlined_call_operand.hbm [shape: f32[32,32], index: 4, kind: input, shape index: {}]
  %s5 = inlined_call_operand.vmem [shape: f32[1,32], index: 5, kind: input, shape index: {}]
  %s6 = inlined_call_operand.hbm [shape: f32[32,128], index: 6, kind: input, shape index: {}]
  %s7 = inlined_call_operand.vmem [shape: f32[1,128], index: 7, kind: input, shape index: {}]
  %s8 = inlined_call_operand.hbm [shape: f32[2,128], index: 8, kind: output, shape index: {0}]
  %s9 = inlined_call_operand.hbm [shape: f32[1,2,32], index: 9, kind: output, shape index: {1}]
  %10 = xla_tuple %s8, %s9
  %s11 = sld [smem:[#allocation0]]
  $region70: #{tpu_custom_call.1} parent=0
    _
  %s13 = ssub.s32 1, %s11
  %s14 = scalar_select 0, %s13, %s11
  $region1: #{tpu_custom_call.1} parent=0
    #allocation3 [shape = 'u8[1024]{0}', space=smem, size = 0x400, scoped, tag = 'input window, operand 0, single buffered']
    #allocation4 [shape = 's32[1]{0}', space=sflag, size = 0x4, scoped, tag = 'scoped memory for tpu_custom_call.1']
    #allocation5 [shape = 's32[1]{0}', space=sflag, size = 0x4, scoped, tag = 'scoped memory for tpu_custom_call.1']
    #allocation6 [shape = 's32[1]{0}', space=sflag, size = 0x4, scoped, tag = 'scoped memory for tpu_custom_call.1']
    #allocation7 [shape = 'u8[8192]{0}', space=vmem, size = 0x2000, scoped, tag = 'input window, operand 1, single buffered']
    #allocation8 [shape = 'u8[16384]{0}', space=vmem, size = 0x4000, scoped, tag = 'input window, operand 3, single buffered']
    #allocation9 [shape = 's32[1]{0}', space=sflag, size = 0x4, scoped, tag = 'scoped memory for tpu_custom_call.1']
    #allocation10 [shape = 'u8[16384]{0}', space=vmem, size = 0x4000, scoped, tag = 'input window, operand 4, single buffered']
    #allocation11 [shape = 'u8[16384]{0}', space=vmem, size = 0x4000, scoped, tag = 'input window, operand 6, single buffered']
    #allocation12 [shape = 's32[1]{0}', space=sflag, size = 0x4, scoped, tag = 'scoped memory for tpu_custom_call.1']
    #allocation13 [shape = 'u8[1024]{0}', space=vmem, size = 0x400, scoped, tag = 'output window, operand 0, single buffered']
    #allocation14 [shape = 'u8[1024]{0}', space=vmem, size = 0x400, scoped, tag = 'output window, operand 1, single buffered']
    #allocation15 [shape = 's32[1]{0}', space=sflag, size = 0x4, scoped, tag = 'scoped memory for tpu_custom_call.1']
    %15 = vsyncpa [#allocation6], 0
    %16 = vsyncpa [#allocation4], 0
    %17 = vsyncpa [#allocation9], 0
    %18 = vsyncpa [#allocation12], 0
    %19 = vsyncpa [#allocation5], 0
    %20 = vsyncpa [#allocation15], 0
    // Predicated region
    $region2: #{tpu_custom_call.1} parent=1 // pred_check
      _
    $region3: #{tpu_custom_call.1} parent=1 // pred_check_branch
      %22 = sbr.rel (0) target = $region5
    $region4: #{tpu_custom_call.1} parent=1 // pred_region
      %s24 = ssub.s32 32, 32
      %25 = vsyncadd [#allocation6], %s24
      %28 = dma.hbm_to_smem %s0, 32, [#allocation3], [#allocation6]
    $region5: #{tpu_custom_call.1} parent=1 // pred_fallthru
      _
    // Predicated region
    $region6: #{tpu_custom_call.1} parent=1 // pred_check
      _
    $region7: #{tpu_custom_call.1} parent=1 // pred_check_branch
      %30 = sbr.rel (0) target = $region9
    $region8: #{tpu_custom_call.1} parent=1 // pred_region
      %s32 = ssub.s32 256, 256
      %33 = vsyncadd [#allocation4], %s32
      %s34 = sshll.u32 [#allocation7], 4
      %s35 = int_to_ptr.vmem [resolvable:$true] %s34
      %40 = dma.hbm_to_vmem [thread:$0]  %s1, 256, %s35, [#allocation4], 16, 16, 1
    $region9: #{tpu_custom_call.1} parent=1 // pred_fallthru
      _
    // Predicated region
    $region10: #{tpu_custom_call.1} parent=1 // pred_check
      _
    $region11: #{tpu_custom_call.1} parent=1 // pred_check_branch
      %42 = sbr.rel (0) target = $region13
    $region12: #{tpu_custom_call.1} parent=1 // pred_region
      _
    $region13: #{tpu_custom_call.1} parent=1 // pred_fallthru
      _
    // Predicated region
    $region14: #{tpu_custom_call.1} parent=1 // pred_check
      _
    $region15: #{tpu_custom_call.1} parent=1 // pred_check_branch
      %44 = sbr.rel (0) target = $region17
    $region16: #{tpu_custom_call.1} parent=1 // pred_region
      %s46 = ssub.s32 512, 512
      %47 = vsyncadd [#allocation9], %s46
      %s48 = sshll.u32 [#allocation8], 4
      %s49 = int_to_ptr.vmem [resolvable:$true] %s48
      %54 = dma.hbm_to_vmem [thread:$0]  %s3, 512, %s49, [#allocation9], 128, 128, 8
    $region17: #{tpu_custom_call.1} parent=1 // pred_fallthru
      _
    // Predicated region
    $region18: #{tpu_custom_call.1} parent=1 // pred_check
      _
    $region19: #{tpu_custom_call.1} parent=1 // pred_check_branch
      %56 = sbr.rel (0) target = $region21
    $region20: #{tpu_custom_call.1} parent=1 // pred_region
      %s58 = ssub.s32 512, 512
      %59 = vsyncadd [#allocation9], %s58
      %s60 = sshll.u32 [#allocation10], 4
      %s61 = int_to_ptr.vmem [resolvable:$true] %s60
      %66 = dma.hbm_to_vmem [thread:$0]  %s4, 512, %s61, [#allocation9], 128, 128, 8
    $region21: #{tpu_custom_call.1} parent=1 // pred_fallthru
      _
    // Predicated region
    $region22: #{tpu_custom_call.1} parent=1 // pred_check
      _
    $region23: #{tpu_custom_call.1} parent=1 // pred_check_branch
      %68 = sbr.rel (0) target = $region25
    $region24: #{tpu_custom_call.1} parent=1 // pred_region
      _
    $region25: #{tpu_custom_call.1} parent=1 // pred_fallthru
      _
    // Predicated region
    $region26: #{tpu_custom_call.1} parent=1 // pred_check
      _
    $region27: #{tpu_custom_call.1} parent=1 // pred_check_branch
      %70 = sbr.rel (0) target = $region29
    $region28: #{tpu_custom_call.1} parent=1 // pred_region
      %s72 = ssub.s32 512, 512
      %73 = vsyncadd [#allocation12], %s72
      %s74 = sshll.u32 [#allocation11], 4
      %s75 = int_to_ptr.vmem [resolvable:$true] %s74
      %80 = dma.hbm_to_vmem [thread:$0]  %s6, 512, %s75, [#allocation12], 128, 128, 8
    $region29: #{tpu_custom_call.1} parent=1 // pred_fallthru
      _
    // Predicated region
    $region30: #{tpu_custom_call.1} parent=1 // pred_check
      _
    $region31: #{tpu_custom_call.1} parent=1 // pred_check_branch
      %82 = sbr.rel (0) target = $region33
    $region32: #{tpu_custom_call.1} parent=1 // pred_region
      _
    $region33: #{tpu_custom_call.1} parent=1 // pred_fallthru
      _
    // Predicated region
    $region34: #{tpu_custom_call.1} parent=1 // pred_check
      _
    $region35: #{tpu_custom_call.1} parent=1 // pred_check_branch
      %84 = sbr.rel (0) target = $region37
    $region36: #{tpu_custom_call.1} parent=1 // pred_region
      %85 = dma.done [#allocation6], 32
    $region37: #{tpu_custom_call.1} parent=1 // pred_fallthru
      _
    // Predicated region
    $region38: #{tpu_custom_call.1} parent=1 // pred_check
      _
    $region39: #{tpu_custom_call.1} parent=1 // pred_check_branch
      %87 = sbr.rel (0) target = $region41
    $region40: #{tpu_custom_call.1} parent=1 // pred_region
      %88 = dma.done [#allocation4], 256
    $region41: #{tpu_custom_call.1} parent=1 // pred_fallthru
      _
    // Predicated region
    $region42: #{tpu_custom_call.1} parent=1 // pred_check
      _
    $region43: #{tpu_custom_call.1} parent=1 // pred_check_branch
      %90 = sbr.rel (0) target = $region45
    $region44: #{tpu_custom_call.1} parent=1 // pred_region
      %91 = dma.done [#allocation9], 512
    $region45: #{tpu_custom_call.1} parent=1 // pred_fallthru
      _
    // Predicated region
    $region46: #{tpu_custom_call.1} parent=1 // pred_check
      _
    $region47: #{tpu_custom_call.1} parent=1 // pred_check_branch
      %93 = sbr.rel (0) target = $region49
    $region48: #{tpu_custom_call.1} parent=1 // pred_region
      %94 = dma.done [#allocation9], 512
    $region49: #{tpu_custom_call.1} parent=1 // pred_fallthru
      _
    // Predicated region
    $region50: #{tpu_custom_call.1} parent=1 // pred_check
      _
    $region51: #{tpu_custom_call.1} parent=1 // pred_check_branch
      %96 = sbr.rel (0) target = $region53
    $region52: #{tpu_custom_call.1} parent=1 // pred_region
      %97 = dma.done [#allocation12], 512
    $region53: #{tpu_custom_call.1} parent=1 // pred_fallthru
      _
    %98 = sfence
    %s99 = sld [smem:[#allocation3]]
    %s100 = scalar_lea.vmem [#allocation7], %s99
    %v101 = vld [vmem:[%s100] sm:$0x1]
    %vm102 = vcmask 253952
    %103 = vst.msk [vmem:[#allocation2] sm:$0x1] %vm102, %v101
    %s104 = sld [smem:[#allocation3 + $0x80]]
    %s105 = scalar_lea.vmem [#allocation7], %s104
    %v106 = vld [vmem:[%s105] sm:$0x1]
    %107 = vst.msk [vmem:[#allocation2 + $0x1] sm:$0x1] %vm102, %v106
    %s108 = sld [smem:[#allocation3 + $0x1]]
    %s109 = scalar_lea.vmem [#allocation7], %s108
    %v110 = vld [vmem:[%s109] sm:$0x1]
    %111 = vst.msk [vmem:[#allocation2 + $0x2] sm:$0x1] %vm102, %v110
    %s112 = sld [smem:[#allocation3 + $0x81]]
    %s113 = scalar_lea.vmem [#allocation7], %s112
    %v114 = vld [vmem:[%s113] sm:$0x1]
    %115 = vst.msk [vmem:[#allocation2 + $0x3] sm:$0x1] %vm102, %v114
    %s116 = sld [smem:[#allocation3 + $0x2]]
    %s117 = scalar_lea.vmem [#allocation7], %s116
    %v118 = vld [vmem:[%s117] sm:$0x1]
    %119 = vst.msk [vmem:[#allocation2 + $0x4] sm:$0x1] %vm102, %v118
    %s120 = sld [smem:[#allocation3 + $0x82]]
    %s121 = scalar_lea.vmem [#allocation7], %s120
    %v122 = vld [vmem:[%s121] sm:$0x1]
    %123 = vst.msk [vmem:[#allocation2 + $0x5] sm:$0x1] %vm102, %v122
    %s124 = sld [smem:[#allocation3 + $0x3]]
    %s125 = scalar_lea.vmem [#allocation7], %s124
    %v126 = vld [vmem:[%s125] sm:$0x1]
    %127 = vst.msk [vmem:[#allocation2 + $0x6] sm:$0x1] %vm102, %v126
    %s128 = sld [smem:[#allocation3 + $0x83]]
    %s129 = scalar_lea.vmem [#allocation7], %s128
    %v130 = vld [vmem:[%s129] sm:$0x1]
    %131 = vst.msk [vmem:[#allocation2 + $0x7] sm:$0x1] %vm102, %v130
    %s132 = sld [smem:[#allocation3 + $0x4]]
    %s133 = scalar_lea.vmem [#allocation7], %s132
    %v134 = vld [vmem:[%s133] sm:$0x1]
    %135 = vst.msk [vmem:[#allocation2 + $0x8] sm:$0x1] %vm102, %v134
    %s136 = sld [smem:[#allocation3 + $0x84]]
    %s137 = scalar_lea.vmem [#allocation7], %s136
    %v138 = vld [vmem:[%s137] sm:$0x1]
    %139 = vst.msk [vmem:[#allocation2 + $0x9] sm:$0x1] %vm102, %v138
    %s140 = sld [smem:[#allocation3 + $0x5]]
    %s141 = scalar_lea.vmem [#allocation7], %s140
    %v142 = vld [vmem:[%s141] sm:$0x1]
    %143 = vst.msk [vmem:[#allocation2 + $0xa] sm:$0x1] %vm102, %v142
    %s144 = sld [smem:[#allocation3 + $0x85]]
    %s145 = scalar_lea.vmem [#allocation7], %s144
    %v146 = vld [vmem:[%s145] sm:$0x1]
    %147 = vst.msk [vmem:[#allocation2 + $0xb] sm:$0x1] %vm102, %v146
    %s148 = sld [smem:[#allocation3 + $0x6]]
    %s149 = scalar_lea.vmem [#allocation7], %s148
    %v150 = vld [vmem:[%s149] sm:$0x1]
    %151 = vst.msk [vmem:[#allocation2 + $0xc] sm:$0x1] %vm102, %v150
    %s152 = sld [smem:[#allocation3 + $0x86]]
    %s153 = scalar_lea.vmem [#allocation7], %s152
    %v154 = vld [vmem:[%s153] sm:$0x1]
    %155 = vst.msk [vmem:[#allocation2 + $0xd] sm:$0x1] %vm102, %v154
    %s156 = sld [smem:[#allocation3 + $0x7]]
    %s157 = scalar_lea.vmem [#allocation7], %s156
    %v158 = vld [vmem:[%s157] sm:$0x1]
    %159 = vst.msk [vmem:[#allocation2 + $0xe] sm:$0x1] %vm102, %v158
    %s160 = sld [smem:[#allocation3 + $0x87]]
    %s161 = scalar_lea.vmem [#allocation7], %s160
    %v162 = vld [vmem:[%s161] sm:$0x1]
    %163 = vst.msk [vmem:[#allocation2 + $0xf] sm:$0x1] %vm102, %v162
    %v164 = vld [vmem:[#allocation2] sm:$0xff]
    %v165 = vld [vmem:[#allocation2 + $0x8] sm:$0xff]
    %v166 = vld [vmem:[#allocation8] sm:$0xff]
    %v167 = vld [vmem:[#allocation8 + $0x8] sm:$0xff]
    %v168 = vld [vmem:[#allocation8 + $0x10] sm:$0xff]
    %v169 = vld [vmem:[#allocation8 + $0x18] sm:$0xff]
    %v170 = vld [vmem:[%s5] sm:$0x1]
    %v172 = vlaneseq
    %v173 = vshrl.u32 %v172, 7
    %v174 = vsub.s32 0, %v173
    %v175 = vrot.slane %v170, %v174
    %vm177 = vcmask 261120
    %v179 = vsel %vm177, %v164, 0
    %v182 = vsel %vm177, %v165, 0
    %184 = vmatprep.subr.mxu0 0.0
    %185 = vmatpush1.msra.mxu0 %v166
    %186 = vmatprep.subr.mxu0 0.0
    %187 = vmatpush1.msra.mxu0 %v167
    %188 = vmatprep.subr.mxu0 0.0
    %189 = vmatpush1.msra.mxu0 %v168
    %190 = vmatprep.subr.mxu0 0.0
    %191 = vmatpush1.msra.mxu0 %v169
    %192 = vmatprep.subr.mxu0 0.0
    %193 = vmatpush1.msra.mxu0 0.0
    %194 = vmatprep.subr.mxu0 0.0
    %195 = vmatpush1.msra.mxu0 0.0
    %196 = vmatprep.subr.mxu0 0.0
    %197 = vmatpush1.msra.mxu0 0.0
    %198 = vmatprep.subr.mxu0 0.0
    %199 = vmatpush1.msra.mxu0 0.0
    %200 = vmatprep.subr.mxu0 0.0
    %201 = vmatpush1.msra.mxu0 0.0
    %202 = vmatprep.subr.mxu0 0.0
    %203 = vmatpush1.msra.mxu0 0.0
    %204 = vmatprep.subr.mxu0 0.0
    %205 = vmatpush1.msra.mxu0 0.0
    %206 = vmatprep.subr.mxu0 0.0
    %207 = vmatpush1.msra.mxu0 0.0
    %208 = vmatprep.subr.mxu0 0.0
    %209 = vmatpush1.msra.mxu0 0.0
    %210 = vmatprep.subr.mxu0 0.0
    %211 = vmatpush1.msra.mxu0 0.0
    %212 = vmatprep.subr.mxu0 0.0
    %213 = vmatpush1.msra.mxu0 0.0
    %214 = vmatprep.subr.mxu0 0.0
    %215 = vmatpush1.msra.mxu0 0.0
    %216 = vmatprep.subr.mxu0 0.0
    %217 = vmatpush1.msra.mxu0 0.0
    %218 = vmatprep.subr.mxu0 0.0
    %219 = vmatpush1.msra.mxu0 0.0
    %220 = vmatprep.subr.mxu0 0.0
    %221 = vmatpush1.msra.mxu0 0.0
    %222 = vmatprep.subr.mxu0 0.0
    %223 = vmatpush1.msra.mxu0 0.0
    %224 = vmatprep.subr.mxu0 0.0
    %225 = vmatpush1.msra.mxu0 0.0
    %226 = vmatprep.subr.mxu0 0.0
    %227 = vmatpush1.msra.mxu0 0.0
    %228 = vmatprep.subr.mxu0 0.0
    %229 = vmatpush1.msra.mxu0 0.0
    %230 = vmatprep.subr.mxu0 0.0
    %231 = vmatpush1.msra.mxu0 0.0
    %232 = vmatprep.subr.mxu0 0.0
    %233 = vmatpush1.msra.mxu0 0.0
    %234 = vmatprep.subr.mxu0 0.0
    %235 = vmatpush1.msra.mxu0 0.0
    %236 = vmatprep.subr.mxu0 0.0
    %237 = vmatpush1.msra.mxu0 0.0
    %238 = vmatprep.subr.mxu0 0.0
    %239 = vmatpush1.msra.mxu0 0.0
    %240 = vmatprep.subr.mxu0 0.0
    %241 = vmatpush1.msra.mxu0 0.0
    %242 = vmatprep.subr.mxu0 0.0
    %243 = vmatpush1.msra.mxu0 0.0
    %244 = vmatprep.subr.mxu0 0.0
    %245 = vmatpush1.msra.mxu0 0.0
    %246 = vmatprep.subr.mxu0 0.0
    %247 = vmatpush1.msra.mxu0 0.0
    %248 = vmatprep.mubr.f32.mxu0 0.0
    %249 = vmatmul.mubr.f32.gmra.mrb[0].mxu0 %v179
    %v250 = vpop.f32.mrb[0].mxu0
    %v251 = vadd.f32 %v175, %v250
    %v252 = vpop.f32.mrb[0].mxu0
    %253 = vmatprep.mubr.f32.mxu0 0.0
    %254 = vmatmul.mubr.f32.gmra.mrb[0].mxu0 %v182
    %v255 = vpop.f32.mrb[0].mxu0
    %v256 = vadd.f32 %v175, %v255
    %v257 = vpop.f32.mrb[0].mxu0
    %258 = vdwg.mxu0
    %v259 = vld [vmem:[#allocation10] sm:$0xff]
    %v260 = vld [vmem:[#allocation10 + $0x8] sm:$0xff]
    %v261 = vld [vmem:[#allocation10 + $0x10] sm:$0xff]
    %v262 = vld [vmem:[#allocation10 + $0x18] sm:$0xff]
    %v263 = vld [vmem:[%s2] sm:$0x3]
    %v265 = vsel %vm177, %v263, 0
    %267 = vmatprep.subr.mxu0 0.0
    %268 = vmatpush1.msra.mxu0 %v259
    %269 = vmatprep.subr.mxu0 0.0
    %270 = vmatpush1.msra.mxu0 %v260
    %271 = vmatprep.subr.mxu0 0.0
    %272 = vmatpush1.msra.mxu0 %v261
    %273 = vmatprep.subr.mxu0 0.0
    %274 = vmatpush1.msra.mxu0 %v262
    %275 = vmatprep.subr.mxu0 0.0
    %276 = vmatpush1.msra.mxu0 0.0
    %277 = vmatprep.subr.mxu0 0.0
    %278 = vmatpush1.msra.mxu0 0.0
    %279 = vmatprep.subr.mxu0 0.0
    %280 = vmatpush1.msra.mxu0 0.0
    %281 = vmatprep.subr.mxu0 0.0
    %282 = vmatpush1.msra.mxu0 0.0
    %283 = vmatprep.subr.mxu0 0.0
    %284 = vmatpush1.msra.mxu0 0.0
    %285 = vmatprep.subr.mxu0 0.0
    %286 = vmatpush1.msra.mxu0 0.0
    %287 = vmatprep.subr.mxu0 0.0
    %288 = vmatpush1.msra.mxu0 0.0
    %289 = vmatprep.subr.mxu0 0.0
    %290 = vmatpush1.msra.mxu0 0.0
    %291 = vmatprep.subr.mxu0 0.0
    %292 = vmatpush1.msra.mxu0 0.0
    %293 = vmatprep.subr.mxu0 0.0
    %294 = vmatpush1.msra.mxu0 0.0
    %295 = vmatprep.subr.mxu0 0.0
    %296 = vmatpush1.msra.mxu0 0.0
    %297 = vmatprep.subr.mxu0 0.0
    %298 = vmatpush1.msra.mxu0 0.0
    %299 = vmatprep.subr.mxu0 0.0
    %300 = vmatpush1.msra.mxu0 0.0
    %301 = vmatprep.subr.mxu0 0.0
    %302 = vmatpush1.msra.mxu0 0.0
    %303 = vmatprep.subr.mxu0 0.0
    %304 = vmatpush1.msra.mxu0 0.0
    %305 = vmatprep.subr.mxu0 0.0
    %306 = vmatpush1.msra.mxu0 0.0
    %307 = vmatprep.subr.mxu0 0.0
    %308 = vmatpush1.msra.mxu0 0.0
    %309 = vmatprep.subr.mxu0 0.0
    %310 = vmatpush1.msra.mxu0 0.0
    %311 = vmatprep.subr.mxu0 0.0
    %312 = vmatpush1.msra.mxu0 0.0
    %313 = vmatprep.subr.mxu0 0.0
    %314 = vmatpush1.msra.mxu0 0.0
    %315 = vmatprep.subr.mxu0 0.0
    %316 = vmatpush1.msra.mxu0 0.0
    %317 = vmatprep.subr.mxu0 0.0
    %318 = vmatpush1.msra.mxu0 0.0
    %319 = vmatprep.subr.mxu0 0.0
    %320 = vmatpush1.msra.mxu0 0.0
    %321 = vmatprep.subr.mxu0 0.0
    %322 = vmatpush1.msra.mxu0 0.0
    %323 = vmatprep.subr.mxu0 0.0
    %324 = vmatpush1.msra.mxu0 0.0
    %325 = vmatprep.subr.mxu0 0.0
    %326 = vmatpush1.msra.mxu0 0.0
    %327 = vmatprep.subr.mxu0 0.0
    %328 = vmatpush1.msra.mxu0 0.0
    %329 = vmatprep.subr.mxu0 0.0
    %330 = vmatpush1.msra.mxu0 0.0
    %331 = vmatprep.mubr.f32.mxu0 0.0
    %332 = vmatmul.mubr.f32.gmra.mrb[0].mxu0 %v265
    %v333 = vpop.f32.mrb[0].mxu0
    %v334 = vadd.f32 0.0, %v333
    %v335 = vpop.f32.mrb[0].mxu0
    %336 = vdwg.mxu0
    %v337 = vadd.f32 %v251, %v334
    %v338 = vtanh.pop %v337
    %v340 = vsel %vm177, %v338, 0
    %342 = vmatprep.subr.mxu0 0.0
    %343 = vmatpush1.msra.mxu0 %v259
    %344 = vmatprep.subr.mxu0 0.0
    %345 = vmatpush1.msra.mxu0 %v260
    %346 = vmatprep.subr.mxu0 0.0
    %347 = vmatpush1.msra.mxu0 %v261
    %348 = vmatprep.subr.mxu0 0.0
    %349 = vmatpush1.msra.mxu0 %v262
    %350 = vmatprep.subr.mxu0 0.0
    %351 = vmatpush1.msra.mxu0 0.0
    %352 = vmatprep.subr.mxu0 0.0
    %353 = vmatpush1.msra.mxu0 0.0
    %354 = vmatprep.subr.mxu0 0.0
    %355 = vmatpush1.msra.mxu0 0.0
    %356 = vmatprep.subr.mxu0 0.0
    %357 = vmatpush1.msra.mxu0 0.0
    %358 = vmatprep.subr.mxu0 0.0
    %359 = vmatpush1.msra.mxu0 0.0
    %360 = vmatprep.subr.mxu0 0.0
    %361 = vmatpush1.msra.mxu0 0.0
    %362 = vmatprep.subr.mxu0 0.0
    %363 = vmatpush1.msra.mxu0 0.0
    %364 = vmatprep.subr.mxu0 0.0
    %365 = vmatpush1.msra.mxu0 0.0
    %366 = vmatprep.subr.mxu0 0.0
    %367 = vmatpush1.msra.mxu0 0.0
    %368 = vmatprep.subr.mxu0 0.0
    %369 = vmatpush1.msra.mxu0 0.0
    %370 = vmatprep.subr.mxu0 0.0
    %371 = vmatpush1.msra.mxu0 0.0
    %372 = vmatprep.subr.mxu0 0.0
    %373 = vmatpush1.msra.mxu0 0.0
    %374 = vmatprep.subr.mxu0 0.0
    %375 = vmatpush1.msra.mxu0 0.0
    %376 = vmatprep.subr.mxu0 0.0
    %377 = vmatpush1.msra.mxu0 0.0
    %378 = vmatprep.subr.mxu0 0.0
    %379 = vmatpush1.msra.mxu0 0.0
    %380 = vmatprep.subr.mxu0 0.0
    %381 = vmatpush1.msra.mxu0 0.0
    %382 = vmatprep.subr.mxu0 0.0
    %383 = vmatpush1.msra.mxu0 0.0
    %384 = vmatprep.subr.mxu0 0.0
    %385 = vmatpush1.msra.mxu0 0.0
    %386 = vmatprep.subr.mxu0 0.0
    %387 = vmatpush1.msra.mxu0 0.0
    %388 = vmatprep.subr.mxu0 0.0
    %389 = vmatpush1.msra.mxu0 0.0
    %390 = vmatprep.subr.mxu0 0.0
    %391 = vmatpush1.msra.mxu0 0.0
    %392 = vmatprep.subr.mxu0 0.0
    %393 = vmatpush1.msra.mxu0 0.0
    %394 = vmatprep.subr.mxu0 0.0
    %395 = vmatpush1.msra.mxu0 0.0
    %396 = vmatprep.subr.mxu0 0.0
    %397 = vmatpush1.msra.mxu0 0.0
    %398 = vmatprep.subr.mxu0 0.0
    %399 = vmatpush1.msra.mxu0 0.0
    %400 = vmatprep.subr.mxu0 0.0
    %401 = vmatpush1.msra.mxu0 0.0
    %402 = vmatprep.subr.mxu0 0.0
    %403 = vmatpush1.msra.mxu0 0.0
    %404 = vmatprep.subr.mxu0 0.0
    %405 = vmatpush1.msra.mxu0 0.0
    %406 = vmatprep.mubr.f32.mxu0 0.0
    %407 = vmatmul.mubr.f32.gmra.mrb[0].mxu0 %v340
    %v408 = vpop.f32.mrb[0].mxu0
    %v409 = vadd.f32 0.0, %v408
    %v410 = vpop.f32.mrb[0].mxu0
    %411 = vdwg.mxu0
    %v413 = vrot.slane %v409, 6
    %v415 = vadd.f32 %v251, %v413
    %v416 = vtanh.pop %v415
    %v418 = vrot.slane %v416, 2
    %v419 = vsel %vm177, %v418, 0
    %421 = vmatprep.subr.mxu0 0.0
    %422 = vmatpush1.msra.mxu0 %v259
    %423 = vmatprep.subr.mxu0 0.0
    %424 = vmatpush1.msra.mxu0 %v260
    %425 = vmatprep.subr.mxu0 0.0
    %426 = vmatpush1.msra.mxu0 %v261
    %427 = vmatprep.subr.mxu0 0.0
    %428 = vmatpush1.msra.mxu0 %v262
    %429 = vmatprep.subr.mxu0 0.0
    %430 = vmatpush1.msra.mxu0 0.0
    %431 = vmatprep.subr.mxu0 0.0
    %432 = vmatpush1.msra.mxu0 0.0
    %433 = vmatprep.subr.mxu0 0.0
    %434 = vmatpush1.msra.mxu0 0.0
    %435 = vmatprep.subr.mxu0 0.0
    %436 = vmatpush1.msra.mxu0 0.0
    %437 = vmatprep.subr.mxu0 0.0
    %438 = vmatpush1.msra.mxu0 0.0
    %439 = vmatprep.subr.mxu0 0.0
    %440 = vmatpush1.msra.mxu0 0.0
    %441 = vmatprep.subr.mxu0 0.0
    %442 = vmatpush1.msra.mxu0 0.0
    %443 = vmatprep.subr.mxu0 0.0
    %444 = vmatpush1.msra.mxu0 0.0
    %445 = vmatprep.subr.mxu0 0.0
    %446 = vmatpush1.msra.mxu0 0.0
    %447 = vmatprep.subr.mxu0 0.0
    %448 = vmatpush1.msra.mxu0 0.0
    %449 = vmatprep.subr.mxu0 0.0
    %450 = vmatpush1.msra.mxu0 0.0
    %451 = vmatprep.subr.mxu0 0.0
    %452 = vmatpush1.msra.mxu0 0.0
    %453 = vmatprep.subr.mxu0 0.0
    %454 = vmatpush1.msra.mxu0 0.0
    %455 = vmatprep.subr.mxu0 0.0
    %456 = vmatpush1.msra.mxu0 0.0
    %457 = vmatprep.subr.mxu0 0.0
    %458 = vmatpush1.msra.mxu0 0.0
    %459 = vmatprep.subr.mxu0 0.0
    %460 = vmatpush1.msra.mxu0 0.0
    %461 = vmatprep.subr.mxu0 0.0
    %462 = vmatpush1.msra.mxu0 0.0
    %463 = vmatprep.subr.mxu0 0.0
    %464 = vmatpush1.msra.mxu0 0.0
    %465 = vmatprep.subr.mxu0 0.0
    %466 = vmatpush1.msra.mxu0 0.0
    %467 = vmatprep.subr.mxu0 0.0
    %468 = vmatpush1.msra.mxu0 0.0
    %469 = vmatprep.subr.mxu0 0.0
    %470 = vmatpush1.msra.mxu0 0.0
    %471 = vmatprep.subr.mxu0 0.0
    %472 = vmatpush1.msra.mxu0 0.0
    %473 = vmatprep.subr.mxu0 0.0
    %474 = vmatpush1.msra.mxu0 0.0
    %475 = vmatprep.subr.mxu0 0.0
    %476 = vmatpush1.msra.mxu0 0.0
    %477 = vmatprep.subr.mxu0 0.0
    %478 = vmatpush1.msra.mxu0 0.0
    %479 = vmatprep.subr.mxu0 0.0
    %480 = vmatpush1.msra.mxu0 0.0
    %481 = vmatprep.subr.mxu0 0.0
    %482 = vmatpush1.msra.mxu0 0.0
    %483 = vmatprep.subr.mxu0 0.0
    %484 = vmatpush1.msra.mxu0 0.0
    %485 = vmatprep.mubr.f32.mxu0 0.0
    %486 = vmatmul.mubr.f32.gmra.mrb[0].mxu0 %v419
    %v487 = vpop.f32.mrb[0].mxu0
    %v488 = vadd.f32 0.0, %v487
    %v489 = vpop.f32.mrb[0].mxu0
    %490 = vdwg.mxu0
    %v492 = vrot.slane %v488, 4
    %v494 = vadd.f32 %v251, %v492
    %v495 = vtanh.pop %v494
    %v497 = vrot.slane %v495, 4
    %v498 = vsel %vm177, %v497, 0
    %500 = vmatprep.subr.mxu0 0.0
    %501 = vmatpush1.msra.mxu0 %v259
    %502 = vmatprep.subr.mxu0 0.0
    %503 = vmatpush1.msra.mxu0 %v260
    %504 = vmatprep.subr.mxu0 0.0
    %505 = vmatpush1.msra.mxu0 %v261
    %506 = vmatprep.subr.mxu0 0.0
    %507 = vmatpush1.msra.mxu0 %v262
    %508 = vmatprep.subr.mxu0 0.0
    %509 = vmatpush1.msra.mxu0 0.0
    %510 = vmatprep.subr.mxu0 0.0
    %511 = vmatpush1.msra.mxu0 0.0
    %512 = vmatprep.subr.mxu0 0.0
    %513 = vmatpush1.msra.mxu0 0.0
    %514 = vmatprep.subr.mxu0 0.0
    %515 = vmatpush1.msra.mxu0 0.0
    %516 = vmatprep.subr.mxu0 0.0
    %517 = vmatpush1.msra.mxu0 0.0
    %518 = vmatprep.subr.mxu0 0.0
    %519 = vmatpush1.msra.mxu0 0.0
    %520 = vmatprep.subr.mxu0 0.0
    %521 = vmatpush1.msra.mxu0 0.0
    %522 = vmatprep.subr.mxu0 0.0
    %523 = vmatpush1.msra.mxu0 0.0
    %524 = vmatprep.subr.mxu0 0.0
    %525 = vmatpush1.msra.mxu0 0.0
    %526 = vmatprep.subr.mxu0 0.0
    %527 = vmatpush1.msra.mxu0 0.0
    %528 = vmatprep.subr.mxu0 0.0
    %529 = vmatpush1.msra.mxu0 0.0
    %530 = vmatprep.subr.mxu0 0.0
    %531 = vmatpush1.msra.mxu0 0.0
    %532 = vmatprep.subr.mxu0 0.0
    %533 = vmatpush1.msra.mxu0 0.0
    %534 = vmatprep.subr.mxu0 0.0
    %535 = vmatpush1.msra.mxu0 0.0
    %536 = vmatprep.subr.mxu0 0.0
    %537 = vmatpush1.msra.mxu0 0.0
    %538 = vmatprep.subr.mxu0 0.0
    %539 = vmatpush1.msra.mxu0 0.0
    %540 = vmatprep.subr.mxu0 0.0
    %541 = vmatpush1.msra.mxu0 0.0
    %542 = vmatprep.subr.mxu0 0.0
    %543 = vmatpush1.msra.mxu0 0.0
    %544 = vmatprep.subr.mxu0 0.0
    %545 = vmatpush1.msra.mxu0 0.0
    %546 = vmatprep.subr.mxu0 0.0
    %547 = vmatpush1.msra.mxu0 0.0
    %548 = vmatprep.subr.mxu0 0.0
    %549 = vmatpush1.msra.mxu0 0.0
    %550 = vmatprep.subr.mxu0 0.0
    %551 = vmatpush1.msra.mxu0 0.0
    %552 = vmatprep.subr.mxu0 0.0
    %553 = vmatpush1.msra.mxu0 0.0
    %554 = vmatprep.subr.mxu0 0.0
    %555 = vmatpush1.msra.mxu0 0.0
    %556 = vmatprep.subr.mxu0 0.0
    %557 = vmatpush1.msra.mxu0 0.0
    %558 = vmatprep.subr.mxu0 0.0
    %559 = vmatpush1.msra.mxu0 0.0
    %560 = vmatprep.subr.mxu0 0.0
    %561 = vmatpush1.msra.mxu0 0.0
    %562 = vmatprep.subr.mxu0 0.0
    %563 = vmatpush1.msra.mxu0 0.0
    %564 = vmatprep.mubr.f32.mxu0 0.0
    %565 = vmatmul.mubr.f32.gmra.mrb[0].mxu0 %v498
    %v566 = vpop.f32.mrb[0].mxu0
    %v567 = vadd.f32 0.0, %v566
    %v568 = vpop.f32.mrb[0].mxu0
    %569 = vdwg.mxu0
    %v571 = vrot.slane %v567, 2
    %v573 = vadd.f32 %v251, %v571
    %v574 = vtanh.pop %v573
    %v576 = vrot.slane %v574, 6
    %v577 = vsel %vm177, %v576, 0
    %579 = vmatprep.subr.mxu0 0.0
    %580 = vmatpush1.msra.mxu0 %v259
    %581 = vmatprep.subr.mxu0 0.0
    %582 = vmatpush1.msra.mxu0 %v260
    %583 = vmatprep.subr.mxu0 0.0
    %584 = vmatpush1.msra.mxu0 %v261
    %585 = vmatprep.subr.mxu0 0.0
    %586 = vmatpush1.msra.mxu0 %v262
    %587 = vmatprep.subr.mxu0 0.0
    %588 = vmatpush1.msra.mxu0 0.0
    %589 = vmatprep.subr.mxu0 0.0
    %590 = vmatpush1.msra.mxu0 0.0
    %591 = vmatprep.subr.mxu0 0.0
    %592 = vmatpush1.msra.mxu0 0.0
    %593 = vmatprep.subr.mxu0 0.0
    %594 = vmatpush1.msra.mxu0 0.0
    %595 = vmatprep.subr.mxu0 0.0
    %596 = vmatpush1.msra.mxu0 0.0
    %597 = vmatprep.subr.mxu0 0.0
    %598 = vmatpush1.msra.mxu0 0.0
    %599 = vmatprep.subr.mxu0 0.0
    %600 = vmatpush1.msra.mxu0 0.0
    %601 = vmatprep.subr.mxu0 0.0
    %602 = vmatpush1.msra.mxu0 0.0
    %603 = vmatprep.subr.mxu0 0.0
    %604 = vmatpush1.msra.mxu0 0.0
    %605 = vmatprep.subr.mxu0 0.0
    %606 = vmatpush1.msra.mxu0 0.0
    %607 = vmatprep.subr.mxu0 0.0
    %608 = vmatpush1.msra.mxu0 0.0
    %609 = vmatprep.subr.mxu0 0.0
    %610 = vmatpush1.msra.mxu0 0.0
    %611 = vmatprep.subr.mxu0 0.0
    %612 = vmatpush1.msra.mxu0 0.0
    %613 = vmatprep.subr.mxu0 0.0
    %614 = vmatpush1.msra.mxu0 0.0
    %615 = vmatprep.subr.mxu0 0.0
    %616 = vmatpush1.msra.mxu0 0.0
    %617 = vmatprep.subr.mxu0 0.0
    %618 = vmatpush1.msra.mxu0 0.0
    %619 = vmatprep.subr.mxu0 0.0
    %620 = vmatpush1.msra.mxu0 0.0
    %621 = vmatprep.subr.mxu0 0.0
    %622 = vmatpush1.msra.mxu0 0.0
    %623 = vmatprep.subr.mxu0 0.0
    %624 = vmatpush1.msra.mxu0 0.0
    %625 = vmatprep.subr.mxu0 0.0
    %626 = vmatpush1.msra.mxu0 0.0
    %627 = vmatprep.subr.mxu0 0.0
    %628 = vmatpush1.msra.mxu0 0.0
    %629 = vmatprep.subr.mxu0 0.0
    %630 = vmatpush1.msra.mxu0 0.0
    %631 = vmatprep.subr.mxu0 0.0
    %632 = vmatpush1.msra.mxu0 0.0
    %633 = vmatprep.subr.mxu0 0.0
    %634 = vmatpush1.msra.mxu0 0.0
    %635 = vmatprep.subr.mxu0 0.0
    %636 = vmatpush1.msra.mxu0 0.0
    %637 = vmatprep.subr.mxu0 0.0
    %638 = vmatpush1.msra.mxu0 0.0
    %639 = vmatprep.subr.mxu0 0.0
    %640 = vmatpush1.msra.mxu0 0.0
    %641 = vmatprep.subr.mxu0 0.0
    %642 = vmatpush1.msra.mxu0 0.0
    %643 = vmatprep.mubr.f32.mxu0 0.0
    %644 = vmatmul.mubr.f32.gmra.mrb[0].mxu0 %v577
    %v645 = vpop.f32.mrb[0].mxu0
    %v646 = vadd.f32 0.0, %v645
    %v647 = vpop.f32.mrb[0].mxu0
    %648 = vdwg.mxu0
    %v649 = vadd.f32 %v256, %v646
    %v650 = vtanh.pop %v649
    %v652 = vsel %vm177, %v650, 0
    %654 = vmatprep.subr.mxu0 0.0
    %655 = vmatpush1.msra.mxu0 %v259
    %656 = vmatprep.subr.mxu0 0.0
    %657 = vmatpush1.msra.mxu0 %v260
    %658 = vmatprep.subr.mxu0 0.0
    %659 = vmatpush1.msra.mxu0 %v261
    %660 = vmatprep.subr.mxu0 0.0
    %661 = vmatpush1.msra.mxu0 %v262
    %662 = vmatprep.subr.mxu0 0.0
    %663 = vmatpush1.msra.mxu0 0.0
    %664 = vmatprep.subr.mxu0 0.0
    %665 = vmatpush1.msra.mxu0 0.0
    %666 = vmatprep.subr.mxu0 0.0
    %667 = vmatpush1.msra.mxu0 0.0
    %668 = vmatprep.subr.mxu0 0.0
    %669 = vmatpush1.msra.mxu0 0.0
    %670 = vmatprep.subr.mxu0 0.0
    %671 = vmatpush1.msra.mxu0 0.0
    %672 = vmatprep.subr.mxu0 0.0
    %673 = vmatpush1.msra.mxu0 0.0
    %674 = vmatprep.subr.mxu0 0.0
    %675 = vmatpush1.msra.mxu0 0.0
    %676 = vmatprep.subr.mxu0 0.0
    %677 = vmatpush1.msra.mxu0 0.0
    %678 = vmatprep.subr.mxu0 0.0
    %679 = vmatpush1.msra.mxu0 0.0
    %680 = vmatprep.subr.mxu0 0.0
    %681 = vmatpush1.msra.mxu0 0.0
    %682 = vmatprep.subr.mxu0 0.0
    %683 = vmatpush1.msra.mxu0 0.0
    %684 = vmatprep.subr.mxu0 0.0
    %685 = vmatpush1.msra.mxu0 0.0
    %686 = vmatprep.subr.mxu0 0.0
    %687 = vmatpush1.msra.mxu0 0.0
    %688 = vmatprep.subr.mxu0 0.0
    %689 = vmatpush1.msra.mxu0 0.0
    %690 = vmatprep.subr.mxu0 0.0
    %691 = vmatpush1.msra.mxu0 0.0
    %692 = vmatprep.subr.mxu0 0.0
    %693 = vmatpush1.msra.mxu0 0.0
    %694 = vmatprep.subr.mxu0 0.0
    %695 = vmatpush1.msra.mxu0 0.0
    %696 = vmatprep.subr.mxu0 0.0
    %697 = vmatpush1.msra.mxu0 0.0
    %698 = vmatprep.subr.mxu0 0.0
    %699 = vmatpush1.msra.mxu0 0.0
    %700 = vmatprep.subr.mxu0 0.0
    %701 = vmatpush1.msra.mxu0 0.0
    %702 = vmatprep.subr.mxu0 0.0
    %703 = vmatpush1.msra.mxu0 0.0
    %704 = vmatprep.subr.mxu0 0.0
    %705 = vmatpush1.msra.mxu0 0.0
    %706 = vmatprep.subr.mxu0 0.0
    %707 = vmatpush1.msra.mxu0 0.0
    %708 = vmatprep.subr.mxu0 0.0
    %709 = vmatpush1.msra.mxu0 0.0
    %710 = vmatprep.subr.mxu0 0.0
    %711 = vmatpush1.msra.mxu0 0.0
    %712 = vmatprep.subr.mxu0 0.0
    %713 = vmatpush1.msra.mxu0 0.0
    %714 = vmatprep.subr.mxu0 0.0
    %715 = vmatpush1.msra.mxu0 0.0
    %716 = vmatprep.subr.mxu0 0.0
    %717 = vmatpush1.msra.mxu0 0.0
    %718 = vmatprep.mubr.f32.mxu0 0.0
    %719 = vmatmul.mubr.f32.gmra.mrb[0].mxu0 %v652
    %v720 = vpop.f32.mrb[0].mxu0
    %v721 = vadd.f32 0.0, %v720
    %v722 = vpop.f32.mrb[0].mxu0
    %723 = vdwg.mxu0
    %v725 = vrot.slane %v721, 6
    %v727 = vadd.f32 %v256, %v725
    %v728 = vtanh.pop %v727
    %v730 = vrot.slane %v728, 2
    %v731 = vsel %vm177, %v730, 0
    %733 = vmatprep.subr.mxu0 0.0
    %734 = vmatpush1.msra.mxu0 %v259
    %735 = vmatprep.subr.mxu0 0.0
    %736 = vmatpush1.msra.mxu0 %v260
    %737 = vmatprep.subr.mxu0 0.0
    %738 = vmatpush1.msra.mxu0 %v261
    %739 = vmatprep.subr.mxu0 0.0
    %740 = vmatpush1.msra.mxu0 %v262
    %741 = vmatprep.subr.mxu0 0.0
    %742 = vmatpush1.msra.mxu0 0.0
    %743 = vmatprep.subr.mxu0 0.0
    %744 = vmatpush1.msra.mxu0 0.0
    %745 = vmatprep.subr.mxu0 0.0
    %746 = vmatpush1.msra.mxu0 0.0
    %747 = vmatprep.subr.mxu0 0.0
    %748 = vmatpush1.msra.mxu0 0.0
    %749 = vmatprep.subr.mxu0 0.0
    %750 = vmatpush1.msra.mxu0 0.0
    %751 = vmatprep.subr.mxu0 0.0
    %752 = vmatpush1.msra.mxu0 0.0
    %753 = vmatprep.subr.mxu0 0.0
    %754 = vmatpush1.msra.mxu0 0.0
    %755 = vmatprep.subr.mxu0 0.0
    %756 = vmatpush1.msra.mxu0 0.0
    %757 = vmatprep.subr.mxu0 0.0
    %758 = vmatpush1.msra.mxu0 0.0
    %759 = vmatprep.subr.mxu0 0.0
    %760 = vmatpush1.msra.mxu0 0.0
    %761 = vmatprep.subr.mxu0 0.0
    %762 = vmatpush1.msra.mxu0 0.0
    %763 = vmatprep.subr.mxu0 0.0
    %764 = vmatpush1.msra.mxu0 0.0
    %765 = vmatprep.subr.mxu0 0.0
    %766 = vmatpush1.msra.mxu0 0.0
    %767 = vmatprep.subr.mxu0 0.0
    %768 = vmatpush1.msra.mxu0 0.0
    %769 = vmatprep.subr.mxu0 0.0
    %770 = vmatpush1.msra.mxu0 0.0
    %771 = vmatprep.subr.mxu0 0.0
    %772 = vmatpush1.msra.mxu0 0.0
    %773 = vmatprep.subr.mxu0 0.0
    %774 = vmatpush1.msra.mxu0 0.0
    %775 = vmatprep.subr.mxu0 0.0
    %776 = vmatpush1.msra.mxu0 0.0
    %777 = vmatprep.subr.mxu0 0.0
    %778 = vmatpush1.msra.mxu0 0.0
    %779 = vmatprep.subr.mxu0 0.0
    %780 = vmatpush1.msra.mxu0 0.0
    %781 = vmatprep.subr.mxu0 0.0
    %782 = vmatpush1.msra.mxu0 0.0
    %783 = vmatprep.subr.mxu0 0.0
    %784 = vmatpush1.msra.mxu0 0.0
    %785 = vmatprep.subr.mxu0 0.0
    %786 = vmatpush1.msra.mxu0 0.0
    %787 = vmatprep.subr.mxu0 0.0
    %788 = vmatpush1.msra.mxu0 0.0
    %789 = vmatprep.subr.mxu0 0.0
    %790 = vmatpush1.msra.mxu0 0.0
    %791 = vmatprep.subr.mxu0 0.0
    %792 = vmatpush1.msra.mxu0 0.0
    %793 = vmatprep.subr.mxu0 0.0
    %794 = vmatpush1.msra.mxu0 0.0
    %795 = vmatprep.subr.mxu0 0.0
    %796 = vmatpush1.msra.mxu0 0.0
    %797 = vmatprep.mubr.f32.mxu0 0.0
    %798 = vmatmul.mubr.f32.gmra.mrb[0].mxu0 %v731
    %v799 = vpop.f32.mrb[0].mxu0
    %v800 = vadd.f32 0.0, %v799
    %v801 = vpop.f32.mrb[0].mxu0
    %802 = vdwg.mxu0
    %v804 = vrot.slane %v800, 4
    %v806 = vadd.f32 %v256, %v804
    %v807 = vtanh.pop %v806
    %v809 = vrot.slane %v807, 4
    %v810 = vsel %vm177, %v809, 0
    %812 = vmatprep.subr.mxu0 0.0
    %813 = vmatpush1.msra.mxu0 %v259
    %814 = vmatprep.subr.mxu0 0.0
    %815 = vmatpush1.msra.mxu0 %v260
    %816 = vmatprep.subr.mxu0 0.0
    %817 = vmatpush1.msra.mxu0 %v261
    %818 = vmatprep.subr.mxu0 0.0
    %819 = vmatpush1.msra.mxu0 %v262
    %820 = vmatprep.subr.mxu0 0.0
    %821 = vmatpush1.msra.mxu0 0.0
    %822 = vmatprep.subr.mxu0 0.0
    %823 = vmatpush1.msra.mxu0 0.0
    %824 = vmatprep.subr.mxu0 0.0
    %825 = vmatpush1.msra.mxu0 0.0
    %826 = vmatprep.subr.mxu0 0.0
    %827 = vmatpush1.msra.mxu0 0.0
    %828 = vmatprep.subr.mxu0 0.0
    %829 = vmatpush1.msra.mxu0 0.0
    %830 = vmatprep.subr.mxu0 0.0
    %831 = vmatpush1.msra.mxu0 0.0
    %832 = vmatprep.subr.mxu0 0.0
    %833 = vmatpush1.msra.mxu0 0.0
    %834 = vmatprep.subr.mxu0 0.0
    %835 = vmatpush1.msra.mxu0 0.0
    %836 = vmatprep.subr.mxu0 0.0
    %837 = vmatpush1.msra.mxu0 0.0
    %838 = vmatprep.subr.mxu0 0.0
    %839 = vmatpush1.msra.mxu0 0.0
    %840 = vmatprep.subr.mxu0 0.0
    %841 = vmatpush1.msra.mxu0 0.0
    %842 = vmatprep.subr.mxu0 0.0
    %843 = vmatpush1.msra.mxu0 0.0
    %844 = vmatprep.subr.mxu0 0.0
    %845 = vmatpush1.msra.mxu0 0.0
    %846 = vmatprep.subr.mxu0 0.0
    %847 = vmatpush1.msra.mxu0 0.0
    %848 = vmatprep.subr.mxu0 0.0
    %849 = vmatpush1.msra.mxu0 0.0
    %850 = vmatprep.subr.mxu0 0.0
    %851 = vmatpush1.msra.mxu0 0.0
    %852 = vmatprep.subr.mxu0 0.0
    %853 = vmatpush1.msra.mxu0 0.0
    %854 = vmatprep.subr.mxu0 0.0
    %855 = vmatpush1.msra.mxu0 0.0
    %856 = vmatprep.subr.mxu0 0.0
    %857 = vmatpush1.msra.mxu0 0.0
    %858 = vmatprep.subr.mxu0 0.0
    %859 = vmatpush1.msra.mxu0 0.0
    %860 = vmatprep.subr.mxu0 0.0
    %861 = vmatpush1.msra.mxu0 0.0
    %862 = vmatprep.subr.mxu0 0.0
    %863 = vmatpush1.msra.mxu0 0.0
    %864 = vmatprep.subr.mxu0 0.0
    %865 = vmatpush1.msra.mxu0 0.0
    %866 = vmatprep.subr.mxu0 0.0
    %867 = vmatpush1.msra.mxu0 0.0
    %868 = vmatprep.subr.mxu0 0.0
    %869 = vmatpush1.msra.mxu0 0.0
    %870 = vmatprep.subr.mxu0 0.0
    %871 = vmatpush1.msra.mxu0 0.0
    %872 = vmatprep.subr.mxu0 0.0
    %873 = vmatpush1.msra.mxu0 0.0
    %874 = vmatprep.subr.mxu0 0.0
    %875 = vmatpush1.msra.mxu0 0.0
    %876 = vmatprep.mubr.f32.mxu0 0.0
    %877 = vmatmul.mubr.f32.gmra.mrb[0].mxu0 %v810
    %v878 = vpop.f32.mrb[0].mxu0
    %v879 = vadd.f32 0.0, %v878
    %v880 = vpop.f32.mrb[0].mxu0
    %881 = vdwg.mxu0
    %v883 = vrot.slane %v879, 2
    %v885 = vadd.f32 %v256, %v883
    %v886 = vtanh.pop %v885
    %vm887 = vcmask 261126
    %888 = vst.msk [vmem:[#allocation14 - $0x6] sm:$0xc0] %vm887, %v886
    %v889 = vld [vmem:[#allocation11] sm:$0xff]
    %v890 = vld [vmem:[#allocation11 + $0x8] sm:$0xff]
    %v891 = vld [vmem:[#allocation11 + $0x10] sm:$0xff]
    %v892 = vld [vmem:[#allocation11 + $0x18] sm:$0xff]
    %v893 = vld [vmem:[%s7] sm:$0x1]
    %v895 = vlaneseq
    %v896 = vshrl.u32 %v895, 7
    %v897 = vsub.s32 0, %v896
    %v898 = vrot.slane %v893, %v897
    %v901 = vrot.slane %v886, 6
    %v902 = vsel %vm177, %v901, 0
    %904 = vmatprep.subr.mxu0 0.0
    %905 = vmatpush1.msra.mxu0 %v889
    %906 = vmatprep.subr.mxu0 0.0
    %907 = vmatpush1.msra.mxu0 %v890
    %908 = vmatprep.subr.mxu0 0.0
    %909 = vmatpush1.msra.mxu0 %v891
    %910 = vmatprep.subr.mxu0 0.0
    %911 = vmatpush1.msra.mxu0 %v892
    %912 = vmatprep.subr.mxu0 0.0
    %913 = vmatpush1.msra.mxu0 0.0
    %914 = vmatprep.subr.mxu0 0.0
    %915 = vmatpush1.msra.mxu0 0.0
    %916 = vmatprep.subr.mxu0 0.0
    %917 = vmatpush1.msra.mxu0 0.0
    %918 = vmatprep.subr.mxu0 0.0
    %919 = vmatpush1.msra.mxu0 0.0
    %920 = vmatprep.subr.mxu0 0.0
    %921 = vmatpush1.msra.mxu0 0.0
    %922 = vmatprep.subr.mxu0 0.0
    %923 = vmatpush1.msra.mxu0 0.0
    %924 = vmatprep.subr.mxu0 0.0
    %925 = vmatpush1.msra.mxu0 0.0
    %926 = vmatprep.subr.mxu0 0.0
    %927 = vmatpush1.msra.mxu0 0.0
    %928 = vmatprep.subr.mxu0 0.0
    %929 = vmatpush1.msra.mxu0 0.0
    %930 = vmatprep.subr.mxu0 0.0
    %931 = vmatpush1.msra.mxu0 0.0
    %932 = vmatprep.subr.mxu0 0.0
    %933 = vmatpush1.msra.mxu0 0.0
    %934 = vmatprep.subr.mxu0 0.0
    %935 = vmatpush1.msra.mxu0 0.0
    %936 = vmatprep.subr.mxu0 0.0
    %937 = vmatpush1.msra.mxu0 0.0
    %938 = vmatprep.subr.mxu0 0.0
    %939 = vmatpush1.msra.mxu0 0.0
    %940 = vmatprep.subr.mxu0 0.0
    %941 = vmatpush1.msra.mxu0 0.0
    %942 = vmatprep.subr.mxu0 0.0
    %943 = vmatpush1.msra.mxu0 0.0
    %944 = vmatprep.subr.mxu0 0.0
    %945 = vmatpush1.msra.mxu0 0.0
    %946 = vmatprep.subr.mxu0 0.0
    %947 = vmatpush1.msra.mxu0 0.0
    %948 = vmatprep.subr.mxu0 0.0
    %949 = vmatpush1.msra.mxu0 0.0
    %950 = vmatprep.subr.mxu0 0.0
    %951 = vmatpush1.msra.mxu0 0.0
    %952 = vmatprep.subr.mxu0 0.0
    %953 = vmatpush1.msra.mxu0 0.0
    %954 = vmatprep.subr.mxu0 0.0
    %955 = vmatpush1.msra.mxu0 0.0
    %956 = vmatprep.subr.mxu0 0.0
    %957 = vmatpush1.msra.mxu0 0.0
    %958 = vmatprep.subr.mxu0 0.0
    %959 = vmatpush1.msra.mxu0 0.0
    %960 = vmatprep.subr.mxu0 0.0
    %961 = vmatpush1.msra.mxu0 0.0
    %962 = vmatprep.subr.mxu0 0.0
    %963 = vmatpush1.msra.mxu0 0.0
    %964 = vmatprep.subr.mxu0 0.0
    %965 = vmatpush1.msra.mxu0 0.0
    %966 = vmatprep.subr.mxu0 0.0
    %967 = vmatpush1.msra.mxu0 0.0
    %968 = vmatprep.mubr.f32.mxu0 0.0
    %969 = vmatmul.mubr.f32.gmra.mrb[0].mxu0 %v902
    %v970 = vpop.f32.mrb[0].mxu0
    %v971 = vadd.f32 %v898, %v970
    %v972 = vpop.f32.mrb[0].mxu0
    %973 = vdwg.mxu0
    %vm974 = vcmask 1041408
    %v975 = vsel %vm974, %v971, -inf
    %976 = vmax.xlane.f32.xlu0 %v975
    %v977 = vpop.xlane.xlu0 %976
    %v978 = vsub.f32 %v971, %v977
    %v979 = vmul.f32 %v978, 1.442695
    %v980 = vpow.pop %v979
    %v981 = vsel %vm974, %v980, 0.0
    %982 = vadd.xlane.f32.xlu0 %v981
    %v983 = vpop.xlane.xlu0 %982
    %v984 = vlog2.pop %v983
    %v985 = vmul.f32 %v984, 0.6931472
    %v986 = vsub.f32 %v978, %v985
    %987 = vst [vmem:[#allocation13] sm:$0x3] %v986
    // Predicated region
    $region54: #{tpu_custom_call.1} parent=1 // pred_check
      _
    $region55: #{tpu_custom_call.1} parent=1 // pred_check_branch
      %989 = sbr.rel (0) target = $region57
    $region56: #{tpu_custom_call.1} parent=1 // pred_region
      %s991 = ssub.s32 32, 32
      %992 = vsyncadd [#allocation5], %s991
      %s994 = sshll.u32 [#allocation13], 4
      %s995 = int_to_ptr.vmem [resolvable:$true] %s994
      %997 = dma.vmem_to_hbm [thread:$0]  %s995, 32, %s8, [#allocation5]
    $region57: #{tpu_custom_call.1} parent=1 // pred_fallthru
      _
    // Predicated region
    $region58: #{tpu_custom_call.1} parent=1 // pred_check
      _
    $region59: #{tpu_custom_call.1} parent=1 // pred_check_branch
      %999 = sbr.rel (0) target = $region61
    $region60: #{tpu_custom_call.1} parent=1 // pred_region
      %s1001 = ssub.s32 32, 32
      %1002 = vsyncadd [#allocation15], %s1001
      %s1004 = sshll.u32 [#allocation14], 4
      %s1005 = int_to_ptr.vmem [resolvable:$true] %s1004
      %1007 = dma.vmem_to_hbm [thread:$0]  %s1005, 32, %s9, [#allocation15]
    $region61: #{tpu_custom_call.1} parent=1 // pred_fallthru
      _
    // Predicated region
    $region62: #{tpu_custom_call.1} parent=1 // pred_check
      _
    $region63: #{tpu_custom_call.1} parent=1 // pred_check_branch
      %1009 = sbr.rel (0) target = $region65
    $region64: #{tpu_custom_call.1} parent=1 // pred_region
      %1010 = dma.done [#allocation5], 32
    $region65: #{tpu_custom_call.1} parent=1 // pred_fallthru
      _
    // Predicated region
    $region66: #{tpu_custom_call.1} parent=1 // pred_check
      _
    $region67: #{tpu_custom_call.1} parent=1 // pred_check_branch
      %1012 = sbr.rel (0) target = $region69
    $region68: #{tpu_custom_call.1} parent=1 // pred_region
      %1013 = dma.done [#allocation15], 32
    $region69: #{tpu_custom_call.1} parent=1 // pred_fallthru
      _
    %1014 = vsyncpa [#allocation4], 1
    %1015 = vsyncpa [#allocation9], 1
    %1016 = vsyncpa [#allocation12], 1
    %1017 = vsyncpa [#allocation5], 1
    %1018 = vsyncpa [#allocation15], 1
    %1019 = vsyncpa [#allocation6], 1

</llo_original>
